<compile_context>
chip_gen: v7x
topology: tpu7x:2x2x1
jax: 0.10.0
libtpu: 0.0.40
codegen_flags: <defaults>
</compile_context>

<pallas_src>
import jax
import jax.numpy as jnp
from jax.experimental import pallas as pl
from jax.experimental.pallas import tpu as pltpu


def reinforce_fwd_kernel(x_ref, w1_ref, b1_ref, w2_ref, b2_ref, o_ref):
    in_dim, bt = x_ref.shape          # [IN, B_tile]
    hidden = w1_ref.shape[0]          # H
    num_actions = w2_ref.shape[0]     # A

    x = x_ref[...]                    # [IN, Bt] f32 (batch on lanes)
    w1 = w1_ref[...]                  # [H, IN]  (PyTorch [out, in] layout)
    w2 = w2_ref[...]                  # [A, H]

    # ---- Layer 1 on the VPU: h[j, b] = b1[j] + sum_k w1[j, k] * x[k, b] -----
    # Bias is the accumulator init (no separate add); K=4 unrolled at trace time.
    h = jnp.broadcast_to(b1_ref[...], (hidden, bt))
    for k in range(in_dim):
        h = h + w1[:, k:k + 1] * x[k:k + 1, :]
    h = jnp.maximum(h, 0.0)                                   # ReLU

    # ---- Layer 2 on the VPU: s[a, b] = b2[a] + sum_j w2[a, j] * h[j, b] -----
    s = jnp.broadcast_to(b2_ref[...], (num_actions, bt))
    for j in range(hidden):
        s = s + w2[:, j:j + 1] * h[j:j + 1, :]

    # ---- softmax over actions (axis 0; batch stays on lanes) ----------------
    if num_actions == 2:
        # softmax([s0, s1]) == [1 - sigmoid(d), sigmoid(d)], d = s1 - s0.
        d = s[1:2, :] - s[0:1, :]
        z = jnp.exp(-jnp.abs(d))                              # in (0, 1]; no overflow
        p_big = pl.reciprocal(1.0 + z, approx=True)           # sigmoid(|d|), EUP rcp
        p1 = jnp.where(d >= 0.0, p_big, 1.0 - p_big)
        o_ref[0:1, :] = 1.0 - p1
        o_ref[1:2, :] = p1
    else:
        m = jnp.max(s, axis=0, keepdims=True)
        e = jnp.exp(s - m)
        denom = jnp.sum(e, axis=0, keepdims=True)
        o_ref[...] = e * pl.reciprocal(denom, approx=True)


def reinforce_forward(x, w1, b1, w2, b2, *, b_tile=512):
    """Forward pass of the REINFORCE policy net.

    x:  [B, 4] states (PyTorch Linear layout).
    w1: [12, 4], b1: [12], w2: [A, 12], b2: [A] (PyTorch [out, in] / [out]).
    Returns action probabilities, shape [B, A], f32.
    """
    B, in_dim = x.shape
    hidden = w1.shape[0]
    num_actions = w2.shape[0]

    # Put batch on the lane axis and pad it to a multiple of the lane tile.
    num_tiles = max(1, (B + b_tile - 1) // b_tile)
    bp = num_tiles * b_tile
    xt = jnp.pad(x.astype(jnp.float32).T, ((0, 0), (0, bp - B)))   # [IN, Bp]

    out_t = pl.pallas_call(
        reinforce_fwd_kernel,
        out_shape=jax.ShapeDtypeStruct((num_actions, bp), jnp.float32),
        grid=(num_tiles,),
        in_specs=[
            pl.BlockSpec((in_dim, b_tile), lambda i: (0, i)),        # x tile (streamed)
            pl.BlockSpec((hidden, in_dim), lambda i: (0, 0)),        # w1 (resident)
            pl.BlockSpec((hidden, 1), lambda i: (0, 0)),             # b1 (resident)
            pl.BlockSpec((num_actions, hidden), lambda i: (0, 0)),   # w2 (resident)
            pl.BlockSpec((num_actions, 1), lambda i: (0, 0)),        # b2 (resident)
        ],
        out_specs=pl.BlockSpec((num_actions, b_tile), lambda i: (0, i)),
        compiler_params=pltpu.CompilerParams(
            dimension_semantics=("parallel",),   # shard batch tiles across TCs (v7x)
        ),
    )(
        xt,
        w1.astype(jnp.float32),
        b1.reshape(hidden, 1).astype(jnp.float32),
        w2.astype(jnp.float32),
        b2.reshape(num_actions, 1).astype(jnp.float32),
    )

    return out_t[:, :B].T                                            # [B, A]


def init_params(key, in_dim=4, hidden=12, num_actions=2):
    # Mimic nn.Linear default init: U(-1/sqrt(fan_in), 1/sqrt(fan_in)); PyTorch layout.
    k1, k2, k3, k4 = jax.random.split(key, 4)
    lim1 = 1.0 / jnp.sqrt(jnp.float32(in_dim))
    lim2 = 1.0 / jnp.sqrt(jnp.float32(hidden))
    w1 = jax.random.uniform(k1, (hidden, in_dim), jnp.float32, -lim1, lim1)
    b1 = jax.random.uniform(k2, (hidden,), jnp.float32, -lim1, lim1)
    w2 = jax.random.uniform(k3, (num_actions, hidden), jnp.float32, -lim2, lim2)
    b2 = jax.random.uniform(k4, (num_actions,), jnp.float32, -lim2, lim2)
    return w1, b1, w2, b2


def reference_forward(x, w1, b1, w2, b2):
    h = jnp.maximum(x @ w1.T + b1, 0.0)
    s = h @ w2.T + b2
    return jax.nn.softmax(s, axis=1)


if __name__ == "__main__":
    key = jax.random.PRNGKey(0)
    kx, kp, kx2 = jax.random.split(key, 3)

    IN, H, A = 4, 12, 2  # CartPole: state dim 4, 2 actions
    w1, b1, w2, b2 = init_params(kp, IN, H, A)

    # Rollout-sized batch: the regime the kernel is designed for.
    B = 1024
    x = jax.random.normal(kx, (B, IN), dtype=jnp.float32)
    out = jax.block_until_ready(reinforce_forward(x, w1, b1, w2, b2))
    ref = reference_forward(x, w1, b1, w2, b2)
    assert out.shape == (B, A)
    assert jnp.allclose(out, ref, atol=2e-3, rtol=2e-3), "mismatch vs JAX reference (batched)"
    assert jnp.allclose(jnp.sum(out, axis=1), 1.0, atol=2e-3), "softmax rows must sum to ~1"

    # Module-native tiny batch (B=2) goes through the same padded path.
    x2 = jax.random.normal(kx2, (2, IN), dtype=jnp.float32)
    out2 = jax.block_until_ready(reinforce_forward(x2, w1, b1, w2, b2))
    ref2 = reference_forward(x2, w1, b1, w2, b2)
    assert out2.shape == (2, A)
    assert jnp.allclose(out2, ref2, atol=2e-3, rtol=2e-3), "mismatch vs JAX reference (B=2)"

    print("KERNEL_OK")
</pallas_src>

<mosaic_0001>
module attributes {stable_mosaic.version = 11 : i64} {
  func.func @reinforce_fwd_kernel(%arg0: i32, %arg1: memref<4x512xf32, #tpu.memory_space<vmem>>, %arg2: memref<12x4xf32, #tpu.memory_space<vmem>>, %arg3: memref<12x1xf32, #tpu.memory_space<vmem>>, %arg4: memref<2x12xf32, #tpu.memory_space<vmem>>, %arg5: memref<2x1xf32, #tpu.memory_space<vmem>>, %arg6: memref<2x512xf32, #tpu.memory_space<vmem>>) attributes {dimension_semantics = [#tpu.dimension_semantics<parallel>], iteration_bounds = array<i64: 2>, scalar_prefetch = 0 : i64, scratch_operands = 0 : i64, tpu.core_type = #tpu.core_type<tc>, window_params = [{transform_indices = @transform_0, window_bounds = array<i64: 4, 512>}, {pipeline_mode = #tpu.pipeline_mode<synchronous>, transform_indices = @transform_1, window_bounds = array<i64: 12, 4>}, {pipeline_mode = #tpu.pipeline_mode<synchronous>, transform_indices = @transform_2, window_bounds = array<i64: 12, 1>}, {pipeline_mode = #tpu.pipeline_mode<synchronous>, transform_indices = @transform_3, window_bounds = array<i64: 2, 12>}, {pipeline_mode = #tpu.pipeline_mode<synchronous>, transform_indices = @transform_4, window_bounds = array<i64: 2, 1>}, {transform_indices = @transform_5, window_bounds = array<i64: 2, 512>}]} {
    %c0 = arith.constant 0 : index
    %c0_0 = arith.constant 0 : index
    %0 = vector.load %arg1[%c0, %c0_0] : memref<4x512xf32, #tpu.memory_space<vmem>>, vector<4x512xf32>
    %c0_1 = arith.constant 0 : index
    %c0_2 = arith.constant 0 : index
    %1 = vector.load %arg2[%c0_1, %c0_2] : memref<12x4xf32, #tpu.memory_space<vmem>>, vector<12x4xf32>
    %c0_3 = arith.constant 0 : index
    %c0_4 = arith.constant 0 : index
    %2 = vector.load %arg4[%c0_3, %c0_4] : memref<2x12xf32, #tpu.memory_space<vmem>>, vector<2x12xf32>
    %c0_5 = arith.constant 0 : index
    %c0_6 = arith.constant 0 : index
    %3 = vector.load %arg3[%c0_5, %c0_6] : memref<12x1xf32, #tpu.memory_space<vmem>>, vector<12x1xf32>
    %4 = vector.shape_cast %3 : vector<12x1xf32> to vector<12x1xf32>
    %5 = vector.broadcast %4 : vector<12x1xf32> to vector<12x512xf32>
    %6 = vector.extract_strided_slice %1 {offsets = [0, 0], sizes = [12, 1], strides = [1, 1]} : vector<12x4xf32> to vector<12x1xf32>
    %7 = vector.extract_strided_slice %0 {offsets = [0, 0], sizes = [1, 512], strides = [1, 1]} : vector<4x512xf32> to vector<1x512xf32>
    %8 = vector.broadcast %6 : vector<12x1xf32> to vector<12x512xf32>
    %9 = vector.broadcast %7 : vector<1x512xf32> to vector<12x512xf32>
    %10 = arith.mulf %8, %9 : vector<12x512xf32>
    %11 = arith.addf %5, %10 : vector<12x512xf32>
    %12 = vector.extract_strided_slice %1 {offsets = [0, 1], sizes = [12, 1], strides = [1, 1]} : vector<12x4xf32> to vector<12x1xf32>
    %13 = vector.extract_strided_slice %0 {offsets = [1, 0], sizes = [1, 512], strides = [1, 1]} : vector<4x512xf32> to vector<1x512xf32>
    %14 = vector.broadcast %12 : vector<12x1xf32> to vector<12x512xf32>
    %15 = vector.broadcast %13 : vector<1x512xf32> to vector<12x512xf32>
    %16 = arith.mulf %14, %15 : vector<12x512xf32>
    %17 = arith.addf %11, %16 : vector<12x512xf32>
    %18 = vector.extract_strided_slice %1 {offsets = [0, 2], sizes = [12, 1], strides = [1, 1]} : vector<12x4xf32> to vector<12x1xf32>
    %19 = vector.extract_strided_slice %0 {offsets = [2, 0], sizes = [1, 512], strides = [1, 1]} : vector<4x512xf32> to vector<1x512xf32>
    %20 = vector.broadcast %18 : vector<12x1xf32> to vector<12x512xf32>
    %21 = vector.broadcast %19 : vector<1x512xf32> to vector<12x512xf32>
    %22 = arith.mulf %20, %21 : vector<12x512xf32>
    %23 = arith.addf %17, %22 : vector<12x512xf32>
    %24 = vector.extract_strided_slice %1 {offsets = [0, 3], sizes = [12, 1], strides = [1, 1]} : vector<12x4xf32> to vector<12x1xf32>
    %25 = vector.extract_strided_slice %0 {offsets = [3, 0], sizes = [1, 512], strides = [1, 1]} : vector<4x512xf32> to vector<1x512xf32>
    %26 = vector.broadcast %24 : vector<12x1xf32> to vector<12x512xf32>
    %27 = vector.broadcast %25 : vector<1x512xf32> to vector<12x512xf32>
    %28 = arith.mulf %26, %27 : vector<12x512xf32>
    %29 = arith.addf %23, %28 : vector<12x512xf32>
    %cst = arith.constant 0.000000e+00 : f32
    %30 = vector.broadcast %cst : f32 to vector<12x512xf32>
    %31 = arith.maximumf %29, %30 : vector<12x512xf32>
    %c0_7 = arith.constant 0 : index
    %c0_8 = arith.constant 0 : index
    %32 = vector.load %arg5[%c0_7, %c0_8] : memref<2x1xf32, #tpu.memory_space<vmem>>, vector<2x1xf32>
    %33 = vector.shape_cast %32 : vector<2x1xf32> to vector<2x1xf32>
    %34 = vector.broadcast %33 : vector<2x1xf32> to vector<2x512xf32>
    %35 = vector.extract_strided_slice %2 {offsets = [0, 0], sizes = [2, 1], strides = [1, 1]} : vector<2x12xf32> to vector<2x1xf32>
    %36 = vector.extract_strided_slice %31 {offsets = [0, 0], sizes = [1, 512], strides = [1, 1]} : vector<12x512xf32> to vector<1x512xf32>
    %37 = vector.broadcast %35 : vector<2x1xf32> to vector<2x512xf32>
    %38 = vector.broadcast %36 : vector<1x512xf32> to vector<2x512xf32>
    %39 = arith.mulf %37, %38 : vector<2x512xf32>
    %40 = arith.addf %34, %39 : vector<2x512xf32>
    %41 = vector.extract_strided_slice %2 {offsets = [0, 1], sizes = [2, 1], strides = [1, 1]} : vector<2x12xf32> to vector<2x1xf32>
    %42 = vector.extract_strided_slice %31 {offsets = [1, 0], sizes = [1, 512], strides = [1, 1]} : vector<12x512xf32> to vector<1x512xf32>
    %43 = vector.broadcast %41 : vector<2x1xf32> to vector<2x512xf32>
    %44 = vector.broadcast %42 : vector<1x512xf32> to vector<2x512xf32>
    %45 = arith.mulf %43, %44 : vector<2x512xf32>
    %46 = arith.addf %40, %45 : vector<2x512xf32>
    %47 = vector.extract_strided_slice %2 {offsets = [0, 2], sizes = [2, 1], strides = [1, 1]} : vector<2x12xf32> to vector<2x1xf32>
    %48 = vector.extract_strided_slice %31 {offsets = [2, 0], sizes = [1, 512], strides = [1, 1]} : vector<12x512xf32> to vector<1x512xf32>
    %49 = vector.broadcast %47 : vector<2x1xf32> to vector<2x512xf32>
    %50 = vector.broadcast %48 : vector<1x512xf32> to vector<2x512xf32>
    %51 = arith.mulf %49, %50 : vector<2x512xf32>
    %52 = arith.addf %46, %51 : vector<2x512xf32>
    %53 = vector.extract_strided_slice %2 {offsets = [0, 3], sizes = [2, 1], strides = [1, 1]} : vector<2x12xf32> to vector<2x1xf32>
    %54 = vector.extract_strided_slice %31 {offsets = [3, 0], sizes = [1, 512], strides = [1, 1]} : vector<12x512xf32> to vector<1x512xf32>
    %55 = vector.broadcast %53 : vector<2x1xf32> to vector<2x512xf32>
    %56 = vector.broadcast %54 : vector<1x512xf32> to vector<2x512xf32>
    %57 = arith.mulf %55, %56 : vector<2x512xf32>
    %58 = arith.addf %52, %57 : vector<2x512xf32>
    %59 = vector.extract_strided_slice %2 {offsets = [0, 4], sizes = [2, 1], strides = [1, 1]} : vector<2x12xf32> to vector<2x1xf32>
    %60 = vector.extract_strided_slice %31 {offsets = [4, 0], sizes = [1, 512], strides = [1, 1]} : vector<12x512xf32> to vector<1x512xf32>
    %61 = vector.broadcast %59 : vector<2x1xf32> to vector<2x512xf32>
    %62 = vector.broadcast %60 : vector<1x512xf32> to vector<2x512xf32>
    %63 = arith.mulf %61, %62 : vector<2x512xf32>
    %64 = arith.addf %58, %63 : vector<2x512xf32>
    %65 = vector.extract_strided_slice %2 {offsets = [0, 5], sizes = [2, 1], strides = [1, 1]} : vector<2x12xf32> to vector<2x1xf32>
    %66 = vector.extract_strided_slice %31 {offsets = [5, 0], sizes = [1, 512], strides = [1, 1]} : vector<12x512xf32> to vector<1x512xf32>
    %67 = vector.broadcast %65 : vector<2x1xf32> to vector<2x512xf32>
    %68 = vector.broadcast %66 : vector<1x512xf32> to vector<2x512xf32>
    %69 = arith.mulf %67, %68 : vector<2x512xf32>
    %70 = arith.addf %64, %69 : vector<2x512xf32>
    %71 = vector.extract_strided_slice %2 {offsets = [0, 6], sizes = [2, 1], strides = [1, 1]} : vector<2x12xf32> to vector<2x1xf32>
    %72 = vector.extract_strided_slice %31 {offsets = [6, 0], sizes = [1, 512], strides = [1, 1]} : vector<12x512xf32> to vector<1x512xf32>
    %73 = vector.broadcast %71 : vector<2x1xf32> to vector<2x512xf32>
    %74 = vector.broadcast %72 : vector<1x512xf32> to vector<2x512xf32>
    %75 = arith.mulf %73, %74 : vector<2x512xf32>
    %76 = arith.addf %70, %75 : vector<2x512xf32>
    %77 = vector.extract_strided_slice %2 {offsets = [0, 7], sizes = [2, 1], strides = [1, 1]} : vector<2x12xf32> to vector<2x1xf32>
    %78 = vector.extract_strided_slice %31 {offsets = [7, 0], sizes = [1, 512], strides = [1, 1]} : vector<12x512xf32> to vector<1x512xf32>
    %79 = vector.broadcast %77 : vector<2x1xf32> to vector<2x512xf32>
    %80 = vector.broadcast %78 : vector<1x512xf32> to vector<2x512xf32>
    %81 = arith.mulf %79, %80 : vector<2x512xf32>
    %82 = arith.addf %76, %81 : vector<2x512xf32>
    %83 = vector.extract_strided_slice %2 {offsets = [0, 8], sizes = [2, 1], strides = [1, 1]} : vector<2x12xf32> to vector<2x1xf32>
    %84 = vector.extract_strided_slice %31 {offsets = [8, 0], sizes = [1, 512], strides = [1, 1]} : vector<12x512xf32> to vector<1x512xf32>
    %85 = vector.broadcast %83 : vector<2x1xf32> to vector<2x512xf32>
    %86 = vector.broadcast %84 : vector<1x512xf32> to vector<2x512xf32>
    %87 = arith.mulf %85, %86 : vector<2x512xf32>
    %88 = arith.addf %82, %87 : vector<2x512xf32>
    %89 = vector.extract_strided_slice %2 {offsets = [0, 9], sizes = [2, 1], strides = [1, 1]} : vector<2x12xf32> to vector<2x1xf32>
    %90 = vector.extract_strided_slice %31 {offsets = [9, 0], sizes = [1, 512], strides = [1, 1]} : vector<12x512xf32> to vector<1x512xf32>
    %91 = vector.broadcast %89 : vector<2x1xf32> to vector<2x512xf32>
    %92 = vector.broadcast %90 : vector<1x512xf32> to vector<2x512xf32>
    %93 = arith.mulf %91, %92 : vector<2x512xf32>
    %94 = arith.addf %88, %93 : vector<2x512xf32>
    %95 = vector.extract_strided_slice %2 {offsets = [0, 10], sizes = [2, 1], strides = [1, 1]} : vector<2x12xf32> to vector<2x1xf32>
    %96 = vector.extract_strided_slice %31 {offsets = [10, 0], sizes = [1, 512], strides = [1, 1]} : vector<12x512xf32> to vector<1x512xf32>
    %97 = vector.broadcast %95 : vector<2x1xf32> to vector<2x512xf32>
    %98 = vector.broadcast %96 : vector<1x512xf32> to vector<2x512xf32>
    %99 = arith.mulf %97, %98 : vector<2x512xf32>
    %100 = arith.addf %94, %99 : vector<2x512xf32>
    %101 = vector.extract_strided_slice %2 {offsets = [0, 11], sizes = [2, 1], strides = [1, 1]} : vector<2x12xf32> to vector<2x1xf32>
    %102 = vector.extract_strided_slice %31 {offsets = [11, 0], sizes = [1, 512], strides = [1, 1]} : vector<12x512xf32> to vector<1x512xf32>
    %103 = vector.broadcast %101 : vector<2x1xf32> to vector<2x512xf32>
    %104 = vector.broadcast %102 : vector<1x512xf32> to vector<2x512xf32>
    %105 = arith.mulf %103, %104 : vector<2x512xf32>
    %106 = arith.addf %100, %105 : vector<2x512xf32>
    %107 = vector.extract_strided_slice %106 {offsets = [1, 0], sizes = [1, 512], strides = [1, 1]} : vector<2x512xf32> to vector<1x512xf32>
    %108 = vector.extract_strided_slice %106 {offsets = [0, 0], sizes = [1, 512], strides = [1, 1]} : vector<2x512xf32> to vector<1x512xf32>
    %109 = arith.subf %107, %108 : vector<1x512xf32>
    %110 = math.absf %109 : vector<1x512xf32>
    %cst_9 = arith.constant 0.000000e+00 : f32
    %111 = vector.broadcast %cst_9 : f32 to vector<1x512xf32>
    %112 = arith.subf %111, %110 : vector<1x512xf32>
    %113 = math.exp %112 : vector<1x512xf32>
    %cst_10 = arith.constant 1.000000e+00 : f32
    %114 = vector.broadcast %cst_10 : f32 to vector<1x512xf32>
    %115 = arith.addf %114, %113 : vector<1x512xf32>
    %116 = tpu.reciprocal %115 {approx = true} : vector<1x512xf32> -> vector<1x512xf32>
    %cst_11 = arith.constant 0.000000e+00 : f32
    %117 = vector.broadcast %cst_11 : f32 to vector<1x512xf32>
    %118 = arith.cmpf oge, %109, %117 : vector<1x512xf32>
    %cst_12 = arith.constant 1.000000e+00 : f32
    %119 = vector.broadcast %cst_12 : f32 to vector<1x512xf32>
    %120 = arith.subf %119, %116 : vector<1x512xf32>
    %121 = arith.select %118, %116, %120 : vector<1x512xi1>, vector<1x512xf32>
    %cst_13 = arith.constant 1.000000e+00 : f32
    %122 = vector.broadcast %cst_13 : f32 to vector<1x512xf32>
    %123 = arith.subf %122, %121 : vector<1x512xf32>
    %c0_14 = arith.constant 0 : index
    %c0_15 = arith.constant 0 : index
    %124 = vector.load %arg6[%c0_14, %c0_15] : memref<2x512xf32, #tpu.memory_space<vmem>>, vector<1x512xf32>
    tpu.vector_store %arg6[%c0_14, %c0_15], %123 {strides = array<i32>} : memref<2x512xf32, #tpu.memory_space<vmem>>, vector<1x512xf32>,
    %c1 = arith.constant 1 : index
    %c0_16 = arith.constant 0 : index
    %125 = vector.load %arg6[%c1, %c0_16] : memref<2x512xf32, #tpu.memory_space<vmem>>, vector<1x512xf32>
    tpu.vector_store %arg6[%c1, %c0_16], %121 {strides = array<i32>} : memref<2x512xf32, #tpu.memory_space<vmem>>, vector<1x512xf32>,
    return
  }
  func.func @transform_0(%arg0: i32) -> (i32, i32) {
    %c0_i32 = arith.constant 0 : i32
    %c0_i32_0 = arith.constant 0 : i32
    return %c0_i32, %arg0 : i32, i32
  }
  func.func @transform_1(%arg0: i32) -> (i32, i32) {
    %c0_i32 = arith.constant 0 : i32
    %c0_i32_0 = arith.constant 0 : i32
    %c0_i32_1 = arith.constant 0 : i32
    return %c0_i32, %c0_i32_0 : i32, i32
  }
  func.func @transform_2(%arg0: i32) -> (i32, i32) {
    %c0_i32 = arith.constant 0 : i32
    %c0_i32_0 = arith.constant 0 : i32
    %c0_i32_1 = arith.constant 0 : i32
    return %c0_i32, %c0_i32_0 : i32, i32
  }
  func.func @transform_3(%arg0: i32) -> (i32, i32) {
    %c0_i32 = arith.constant 0 : i32
    %c0_i32_0 = arith.constant 0 : i32
    %c0_i32_1 = arith.constant 0 : i32
    return %c0_i32, %c0_i32_0 : i32, i32
  }
  func.func @transform_4(%arg0: i32) -> (i32, i32) {
    %c0_i32 = arith.constant 0 : i32
    %c0_i32_0 = arith.constant 0 : i32
    %c0_i32_1 = arith.constant 0 : i32
    return %c0_i32, %c0_i32_0 : i32, i32
  }
  func.func @transform_5(%arg0: i32) -> (i32, i32) {
    %c0_i32 = arith.constant 0 : i32
    %c0_i32_0 = arith.constant 0 : i32
    return %c0_i32, %arg0 : i32, i32
  }
}

</mosaic_0001>

<llo_original>
// kernel: tpu_custom_call.1
$region0: #{tpu_custom_call.1}
  #allocation0 [shape = 'u32[]', space=smem, size = 0x4, offset = 0x4, fixed_abs, tag = 'smem constant byte address 0x4 - core index']
  #allocation1 [shape = 'u32[144,128]{1,0:T(1,128)}', space=vmem, size = 0x12000, scoped, tag = 'internal scratch']
  %s0 = inlined_call_operand.vmem [shape: f32[4,1024], index: 0, kind: input, shape index: {}]
  %s1 = inlined_call_operand.vmem [shape: f32[12,4], index: 1, kind: input, shape index: {}]
  %s2 = inlined_call_operand.vmem [shape: f32[12,1], index: 2, kind: input, shape index: {}]
  %s3 = inlined_call_operand.vmem [shape: f32[2,12], index: 3, kind: input, shape index: {}]
  %s4 = inlined_call_operand.vmem [shape: f32[2,1], index: 4, kind: input, shape index: {}]
  %s5 = inlined_call_operand.hbm [shape: f32[2,1024], index: 5, kind: output, shape index: {}]
  %s6 = sld [smem:[#allocation0]]
  $region53: #{tpu_custom_call.1} parent=0
    _
  %s8 = ssub.s32 1, %s6
  %s9 = scalar_select 0, %s8, %s6
  $region1: #{tpu_custom_call.1} parent=0
    #allocation2 [shape = 'u8[8192]{0}', space=vmem, size = 0x2000, scoped, tag = 'output window, operand 0']
    #allocation3 [shape = 's32[2]{0}', space=sflag, size = 0x8, scoped, tag = 'scoped memory for tpu_custom_call.1']
    %10 = vsyncpa [#allocation3], 0
    %s11 = scalar_lea.sflag [#allocation3], 1
    %12 = vsyncpa %s11, 0
    loop: start=0, step=1, limit=4
    $region2: #{tpu_custom_call.1} parent=1 // loop_pre_header
      _
    $region3: #{tpu_custom_call.1} parent=1 // loop_header
      %s14 = sphi 0, %s18
      %p15 = scmp.ge.s32.totalorder %s14, 4
      %s24 = sphi 0, %s26
      %s27 = sphi 0, %s24
      %s28 = sphi 0, %s27
      %s44 = sphi 0, %s28
      %s48 = sphi 0, %s48
      %s50 = sphi 0, %s48
      %s51 = sphi 0, %s50
      %s65 = sphi 0, %s51
      %s69 = sphi 0, %s69
      %s71 = sphi 0, %s69
      %s72 = sphi 0, %s71
      %s86 = sphi 0, %s72
      %s90 = sphi 0, %s90
      %s92 = sphi 0, %s90
      %s93 = sphi 0, %s92
      %s107 = sphi 0, %s93
      %s111 = sphi 0, %s111
      %s113 = sphi 0, %s111
      %s114 = sphi 0, %s113
      %s128 = sphi 0, %s114
      %s134 = sphi 0, %s136
      %s137 = sphi 0, %s134
      %s138 = sphi 0, %s137
      %s154 = sphi 0, %s138
    $region4: #{tpu_custom_call.1} parent=1 // loop_header_branch
      %17 = sbr.rel (%p15) target = $region8
    $region5: #{tpu_custom_call.1} parent=1 // loop_body
      %s19 = ssub.s32 %s14, 1
      %s20 = ssub.s32 %s14, 2
      %s21 = sadd.s32 %s14, 1
      %s22 = ssub.s32 %s14, %s21
      %p23 = scmp.eq.s32.totalorder %s22, 0
      %s25 = sadd.s32 %s24, 1
      %s26 = scalar_select %p23, %s24, %s25
      %p29 = pneg %p23
      %p30 = scmp.eq.s32.totalorder %s14, 1
      %p31 = por %p29, %p30
      %p32 = scmp.ne.s32.totalorder %s24, %s27
      %p33 = scmp.eq.s32.totalorder %s14, 0
      %p34 = por %p32, %p33
      %p35 = scmp.ne.s32.totalorder %s24, %s27
      %p36 = scmp.eq.s32.totalorder %s19, 1
      %p37 = por %p35, %p36
      %p38 = scmp.ne.s32.totalorder %s27, %s28
      %p39 = scmp.eq.s32.totalorder %s19, 0
      %p40 = por %p38, %p39
      %p41 = scmp.ne.s32.totalorder %s27, %s28
      %p42 = scmp.eq.s32.totalorder %s20, 1
      %p43 = por %p41, %p42
      %p45 = scmp.ne.s32.totalorder %s28, %s44
      %p46 = scmp.eq.s32.totalorder %s20, 0
      %p47 = por %p45, %p46
      %s49 = sadd.s32 %s48, 1
      %p52 = scmp.eq.s32.totalorder %s14, 1
      %p53 = scmp.ne.s32.totalorder %s48, %s50
      %p54 = scmp.eq.s32.totalorder %s14, 0
      %p55 = por %p53, %p54
      %p56 = scmp.ne.s32.totalorder %s48, %s50
      %p57 = scmp.eq.s32.totalorder %s19, 1
      %p58 = por %p56, %p57
      %p59 = scmp.ne.s32.totalorder %s50, %s51
      %p60 = scmp.eq.s32.totalorder %s19, 0
      %p61 = por %p59, %p60
      %p62 = scmp.ne.s32.totalorder %s50, %s51
      %p63 = scmp.eq.s32.totalorder %s20, 1
      %p64 = por %p62, %p63
      %p66 = scmp.ne.s32.totalorder %s51, %s65
      %p67 = scmp.eq.s32.totalorder %s20, 0
      %p68 = por %p66, %p67
      %s70 = sadd.s32 %s69, 1
      %p73 = scmp.eq.s32.totalorder %s14, 1
      %p74 = scmp.ne.s32.totalorder %s69, %s71
      %p75 = scmp.eq.s32.totalorder %s14, 0
      %p76 = por %p74, %p75
      %p77 = scmp.ne.s32.totalorder %s69, %s71
      %p78 = scmp.eq.s32.totalorder %s19, 1
      %p79 = por %p77, %p78
      %p80 = scmp.ne.s32.totalorder %s71, %s72
      %p81 = scmp.eq.s32.totalorder %s19, 0
      %p82 = por %p80, %p81
      %p83 = scmp.ne.s32.totalorder %s71, %s72
      %p84 = scmp.eq.s32.totalorder %s20, 1
      %p85 = por %p83, %p84
      %p87 = scmp.ne.s32.totalorder %s72, %s86
      %p88 = scmp.eq.s32.totalorder %s20, 0
      %p89 = por %p87, %p88
      %s91 = sadd.s32 %s90, 1
      %p94 = scmp.eq.s32.totalorder %s14, 1
      %p95 = scmp.ne.s32.totalorder %s90, %s92
      %p96 = scmp.eq.s32.totalorder %s14, 0
      %p97 = por %p95, %p96
      %p98 = scmp.ne.s32.totalorder %s90, %s92
      %p99 = scmp.eq.s32.totalorder %s19, 1
      %p100 = por %p98, %p99
      %p101 = scmp.ne.s32.totalorder %s92, %s93
      %p102 = scmp.eq.s32.totalorder %s19, 0
      %p103 = por %p101, %p102
      %p104 = scmp.ne.s32.totalorder %s92, %s93
      %p105 = scmp.eq.s32.totalorder %s20, 1
      %p106 = por %p104, %p105
      %p108 = scmp.ne.s32.totalorder %s93, %s107
      %p109 = scmp.eq.s32.totalorder %s20, 0
      %p110 = por %p108, %p109
      %s112 = sadd.s32 %s111, 1
      %p115 = scmp.eq.s32.totalorder %s14, 1
      %p116 = scmp.ne.s32.totalorder %s111, %s113
      %p117 = scmp.eq.s32.totalorder %s14, 0
      %p118 = por %p116, %p117
      %p119 = scmp.ne.s32.totalorder %s111, %s113
      %p120 = scmp.eq.s32.totalorder %s19, 1
      %p121 = por %p119, %p120
      %p122 = scmp.ne.s32.totalorder %s113, %s114
      %p123 = scmp.eq.s32.totalorder %s19, 0
      %p124 = por %p122, %p123
      %p125 = scmp.ne.s32.totalorder %s113, %s114
      %p126 = scmp.eq.s32.totalorder %s20, 1
      %p127 = por %p125, %p126
      %p129 = scmp.ne.s32.totalorder %s114, %s128
      %p130 = scmp.eq.s32.totalorder %s20, 0
      %p131 = por %p129, %p130
      %s132 = ssub.s32 %s14, %s21
      %p133 = scmp.eq.s32.totalorder %s132, 0
      %s135 = sadd.s32 %s134, 1
      %s136 = scalar_select %p133, %s134, %s135
      %p139 = pneg %p133
      %p140 = scmp.eq.s32.totalorder %s14, 1
      %p141 = por %p139, %p140
      %p142 = scmp.ne.s32.totalorder %s134, %s137
      %p143 = scmp.eq.s32.totalorder %s14, 0
      %p144 = por %p142, %p143
      %p145 = scmp.ne.s32.totalorder %s134, %s137
      %p146 = scmp.eq.s32.totalorder %s19, 1
      %p147 = por %p145, %p146
      %p148 = scmp.ne.s32.totalorder %s137, %s138
      %p149 = scmp.eq.s32.totalorder %s19, 0
      %p150 = por %p148, %p149
      %p151 = scmp.ne.s32.totalorder %s137, %s138
      %p152 = scmp.eq.s32.totalorder %s20, 1
      %p153 = por %p151, %p152
      %p155 = scmp.ne.s32.totalorder %s138, %s154
      %p156 = scmp.eq.s32.totalorder %s20, 0
      %p157 = por %p155, %p156
      %p158 = scmp.le.s32.totalorder 1, %s14
      %p159 = scmp.lt.s32.totalorder %s14, 3
      %p160 = pnand %p158, %p159
      %p161 = pneg %p160
      // Predicated region
      $region9: #{tpu_custom_call.1} parent=5 // pred_check
        _
      $region10: #{tpu_custom_call.1} parent=5 // pred_check_branch
        %163 = sbr.rel (%p160) target = $region12
      $region11: #{tpu_custom_call.1} parent=5 // pred_region
        %s164 = ssub.s32 %s14, 1
        // Predicated region
        $region13: #{tpu_custom_call.1} parent=11 // pred_check
          %p165 = pneg %p61
        $region14: #{tpu_custom_call.1} parent=11 // pred_check_branch
          %167 = sbr.rel (%p165) target = $region16
        $region15: #{tpu_custom_call.1} parent=11 // pred_region
          _
        $region16: #{tpu_custom_call.1} parent=11 // pred_fallthru
          _
        // Predicated region
        $region17: #{tpu_custom_call.1} parent=11 // pred_check
          %p168 = pneg %p82
        $region18: #{tpu_custom_call.1} parent=11 // pred_check_branch
          %170 = sbr.rel (%p168) target = $region20
        $region19: #{tpu_custom_call.1} parent=11 // pred_region
          _
        $region20: #{tpu_custom_call.1} parent=11 // pred_fallthru
          _
        // Predicated region
        $region21: #{tpu_custom_call.1} parent=11 // pred_check
          %p171 = pneg %p103
        $region22: #{tpu_custom_call.1} parent=11 // pred_check_branch
          %173 = sbr.rel (%p171) target = $region24
        $region23: #{tpu_custom_call.1} parent=11 // pred_region
          _
        $region24: #{tpu_custom_call.1} parent=11 // pred_fallthru
          _
        // Predicated region
        $region25: #{tpu_custom_call.1} parent=11 // pred_check
          %p174 = pneg %p124
        $region26: #{tpu_custom_call.1} parent=11 // pred_check_branch
          %176 = sbr.rel (%p174) target = $region28
        $region27: #{tpu_custom_call.1} parent=11 // pred_region
          _
        $region28: #{tpu_custom_call.1} parent=11 // pred_fallthru
          _
      $region12: #{tpu_custom_call.1} parent=5 // pred_fallthru
        _
      %p177 = scmp.lt.s32.totalorder %s14, 2
      // Predicated region
      $region29: #{tpu_custom_call.1} parent=5 // pred_check
        %p178 = pneg %p177
      $region30: #{tpu_custom_call.1} parent=5 // pred_check_branch
        %180 = sbr.rel (%p178) target = $region32
      $region31: #{tpu_custom_call.1} parent=5 // pred_region
        // Predicated region
        $region33: #{tpu_custom_call.1} parent=31 // pred_check
          %p181 = pneg %p34
        $region34: #{tpu_custom_call.1} parent=31 // pred_check_branch
          %183 = sbr.rel (%p181) target = $region36
        $region35: #{tpu_custom_call.1} parent=31 // pred_region
          %s184 = smul.u32 4, %s14
          %p185 = scmp.lt.s32.totalorder %s184, 7
          %s186 = scalar_select %p185, %s184, 7
          %s187 = smul.addr %s186, 4
          %s188 = scalar_lea.vmem %s0, %s187
          %s189 = smul.u32 4, %s14
        $region36: #{tpu_custom_call.1} parent=31 // pred_fallthru
          _
      $region32: #{tpu_custom_call.1} parent=5 // pred_fallthru
        _
      %p190 = scmp.le.s32.totalorder 1, %s14
      %p191 = scmp.lt.s32.totalorder %s14, 3
      %p192 = pnand %p190, %p191
      %p193 = pneg %p192
      // Predicated region
      $region37: #{tpu_custom_call.1} parent=5 // pred_check
        _
      $region38: #{tpu_custom_call.1} parent=5 // pred_check_branch
        %195 = sbr.rel (%p192) target = $region40
      $region39: #{tpu_custom_call.1} parent=5 // pred_region
        %s196 = ssub.s32 %s14, 1
        %s197 = smul.u32 4, %s19
        %p198 = scmp.lt.s32.totalorder %s197, 7
        %s199 = scalar_select %p198, %s197, 7
        %s200 = smul.addr %s199, 4
        %s201 = scalar_lea.vmem %s0, %s200
        %p202 = pneg %p40
        %p203 = pneg %p37
        %p204 = pneg %p61
        %p205 = pneg %p58
        %p206 = pneg %p82
        %p207 = pneg %p79
        %p208 = pneg %p103
        %p209 = pneg %p100
        %p210 = pneg %p124
        %p211 = pneg %p121
        %p212 = pneg %p150
        %p213 = pneg %p147
        %s214 = sand.u32 %s137, 1
        %s215 = scalar_lea.sflag [#allocation3], %s214
        %s216 = sand.u32 %s137, 1
        %s217 = smul.addr %s216, 8
        %s218 = scalar_lea.vmem [#allocation2], %s217
        %s219 = smul.u32 4, %s19
        %p220 = scmp.lt.s32.totalorder %s219, 7
        %s221 = scalar_select %p220, %s219, 7
        %s222 = smul.addr %s221, 4
        %s223 = scalar_lea.vmem %s0, %s222
        %s224 = smul.u32 4, %s19
        %s225 = smul.u32 4, %s19
        %v226 = vld [vmem:[%s223] sm:$0xff]
        %v227 = vld [vmem:[%s223 + $0x8] sm:$0xff]
        %v228 = vld [vmem:[%s1] sm:$0xff]
        %v229 = vld [vmem:[%s1 + $0x8] sm:$0xf]
        %v230 = vld [vmem:[%s3] sm:$0x3]
        %v231 = vld [vmem:[%s2] sm:$0xff]
        %v232 = vld [vmem:[%s2 + $0x8] sm:$0xf]
        %234 = vset.pattern.permute.xlu0 0
        %235 = vperm.xlu0 %234, %v231
        %v236 = vpop.permute.xlu0 %235
        %239 = vset.pattern.permute.xlu0 0
        %240 = vperm.xlu0 %239, %v232
        %v241 = vpop.permute.xlu0 %240
        %244 = vset.pattern.permute.xlu0 0
        %245 = vperm.xlu0 %244, %v228
        %v246 = vpop.permute.xlu0 %245
        %249 = vset.pattern.permute.xlu0 0
        %250 = vperm.xlu0 %249, %v229
        %v251 = vpop.permute.xlu0 %250
        %v255 = vlaneseq
        %v256 = vshrl.u32 %v255, 7
        %v257 = vsub.s32 0, %v256
        %v258 = vrot.slane %v226, %v257
        %v259 = vlaneseq
        %v260 = vshrl.u32 %v259, 7
        %v261 = vsub.s32 4, %v260
        %v262 = vrot.slane %v226, %v261
        %v263 = vlaneseq
        %v264 = vshrl.u32 %v263, 7
        %v265 = vsub.s32 0, %v264
        %v266 = vrot.slane %v227, %v265
        %v267 = vlaneseq
        %v268 = vshrl.u32 %v267, 7
        %v269 = vsub.s32 4, %v268
        %v270 = vrot.slane %v227, %v269
        %v275 = vlaneseq
        %v276 = vshrl.u32 %v275, 7
        %v277 = vsub.s32 0, %v276
        %v278 = vrot.slane %v258, %v277
        %v279 = vlaneseq
        %v280 = vshrl.u32 %v279, 7
        %v281 = vsub.s32 0, %v280
        %v282 = vrot.slane %v262, %v281
        %v283 = vlaneseq
        %v284 = vshrl.u32 %v283, 7
        %v285 = vsub.s32 0, %v284
        %v286 = vrot.slane %v266, %v285
        %v287 = vlaneseq
        %v288 = vshrl.u32 %v287, 7
        %v289 = vsub.s32 0, %v288
        %v290 = vrot.slane %v270, %v289
        %v291 = vmul.f32 %v246, %v278
        %v292 = vmul.f32 %v246, %v282
        %v293 = vmul.f32 %v246, %v286
        %v294 = vmul.f32 %v246, %v290
        %v295 = vmul.f32 %v251, %v278
        %v296 = vmul.f32 %v251, %v282
        %v297 = vmul.f32 %v251, %v286
        %v298 = vmul.f32 %v251, %v290
        %v299 = vadd.f32 %v236, %v291
        %v300 = vadd.f32 %v236, %v292
        %v301 = vadd.f32 %v236, %v293
        %v302 = vadd.f32 %v236, %v294
        %v303 = vadd.f32 %v241, %v295
        %v304 = vadd.f32 %v241, %v296
        %v305 = vadd.f32 %v241, %v297
        %v306 = vadd.f32 %v241, %v298
        %307 = vset.pattern.permute.xlu0 1
        %308 = vperm.xlu0 %307, %v228
        %v309 = vpop.permute.xlu0 %308
        %311 = vset.pattern.permute.xlu0 1
        %312 = vperm.xlu0 %311, %v229
        %v313 = vpop.permute.xlu0 %312
        %v315 = vlaneseq
        %v316 = vshrl.u32 %v315, 7
        %v317 = vsub.s32 1, %v316
        %v318 = vrot.slane %v226, %v317
        %v319 = vlaneseq
        %v320 = vshrl.u32 %v319, 7
        %v321 = vsub.s32 5, %v320
        %v322 = vrot.slane %v226, %v321
        %v323 = vlaneseq
        %v324 = vshrl.u32 %v323, 7
        %v325 = vsub.s32 1, %v324
        %v326 = vrot.slane %v227, %v325
        %v327 = vlaneseq
        %v328 = vshrl.u32 %v327, 7
        %v329 = vsub.s32 5, %v328
        %v330 = vrot.slane %v227, %v329
        %v335 = vlaneseq
        %v336 = vshrl.u32 %v335, 7
        %v337 = vsub.s32 1, %v336
        %v338 = vrot.slane %v318, %v337
        %v339 = vlaneseq
        %v340 = vshrl.u32 %v339, 7
        %v341 = vsub.s32 1, %v340
        %v342 = vrot.slane %v322, %v341
        %v343 = vlaneseq
        %v344 = vshrl.u32 %v343, 7
        %v345 = vsub.s32 1, %v344
        %v346 = vrot.slane %v326, %v345
        %v347 = vlaneseq
        %v348 = vshrl.u32 %v347, 7
        %v349 = vsub.s32 1, %v348
        %v350 = vrot.slane %v330, %v349
        %v351 = vmul.f32 %v309, %v338
        %v352 = vmul.f32 %v309, %v342
        %v353 = vmul.f32 %v309, %v346
        %v354 = vmul.f32 %v309, %v350
        %v355 = vmul.f32 %v313, %v338
        %v356 = vmul.f32 %v313, %v342
        %v357 = vmul.f32 %v313, %v346
        %v358 = vmul.f32 %v313, %v350
        %v359 = vadd.f32 %v299, %v351
        %v360 = vadd.f32 %v300, %v352
        %v361 = vadd.f32 %v301, %v353
        %v362 = vadd.f32 %v302, %v354
        %v363 = vadd.f32 %v303, %v355
        %v364 = vadd.f32 %v304, %v356
        %v365 = vadd.f32 %v305, %v357
        %v366 = vadd.f32 %v306, %v358
        %367 = vset.pattern.permute.xlu0 2
        %368 = vperm.xlu0 %367, %v228
        %v369 = vpop.permute.xlu0 %368
        %371 = vset.pattern.permute.xlu0 2
        %372 = vperm.xlu0 %371, %v229
        %v373 = vpop.permute.xlu0 %372
        %v375 = vlaneseq
        %v376 = vshrl.u32 %v375, 7
        %v377 = vsub.s32 2, %v376
        %v378 = vrot.slane %v226, %v377
        %v379 = vlaneseq
        %v380 = vshrl.u32 %v379, 7
        %v381 = vsub.s32 6, %v380
        %v382 = vrot.slane %v226, %v381
        %v383 = vlaneseq
        %v384 = vshrl.u32 %v383, 7
        %v385 = vsub.s32 2, %v384
        %v386 = vrot.slane %v227, %v385
        %v387 = vlaneseq
        %v388 = vshrl.u32 %v387, 7
        %v389 = vsub.s32 6, %v388
        %v390 = vrot.slane %v227, %v389
        %v395 = vlaneseq
        %v396 = vshrl.u32 %v395, 7
        %v397 = vsub.s32 2, %v396
        %v398 = vrot.slane %v378, %v397
        %v399 = vlaneseq
        %v400 = vshrl.u32 %v399, 7
        %v401 = vsub.s32 2, %v400
        %v402 = vrot.slane %v382, %v401
        %v403 = vlaneseq
        %v404 = vshrl.u32 %v403, 7
        %v405 = vsub.s32 2, %v404
        %v406 = vrot.slane %v386, %v405
        %v407 = vlaneseq
        %v408 = vshrl.u32 %v407, 7
        %v409 = vsub.s32 2, %v408
        %v410 = vrot.slane %v390, %v409
        %v411 = vmul.f32 %v369, %v398
        %v412 = vmul.f32 %v369, %v402
        %v413 = vmul.f32 %v369, %v406
        %v414 = vmul.f32 %v369, %v410
        %v415 = vmul.f32 %v373, %v398
        %v416 = vmul.f32 %v373, %v402
        %v417 = vmul.f32 %v373, %v406
        %v418 = vmul.f32 %v373, %v410
        %v419 = vadd.f32 %v359, %v411
        %v420 = vadd.f32 %v360, %v412
        %v421 = vadd.f32 %v361, %v413
        %v422 = vadd.f32 %v362, %v414
        %v423 = vadd.f32 %v363, %v415
        %v424 = vadd.f32 %v364, %v416
        %v425 = vadd.f32 %v365, %v417
        %v426 = vadd.f32 %v366, %v418
        %427 = vset.pattern.permute.xlu0 3
        %428 = vperm.xlu0 %427, %v228
        %v429 = vpop.permute.xlu0 %428
        %431 = vset.pattern.permute.xlu0 3
        %432 = vperm.xlu0 %431, %v229
        %v433 = vpop.permute.xlu0 %432
        %v435 = vlaneseq
        %v436 = vshrl.u32 %v435, 7
        %v437 = vsub.s32 3, %v436
        %v438 = vrot.slane %v226, %v437
        %v439 = vlaneseq
        %v440 = vshrl.u32 %v439, 7
        %v441 = vsub.s32 7, %v440
        %v442 = vrot.slane %v226, %v441
        %v443 = vlaneseq
        %v444 = vshrl.u32 %v443, 7
        %v445 = vsub.s32 3, %v444
        %v446 = vrot.slane %v227, %v445
        %v447 = vlaneseq
        %v448 = vshrl.u32 %v447, 7
        %v449 = vsub.s32 7, %v448
        %v450 = vrot.slane %v227, %v449
        %v455 = vlaneseq
        %v456 = vshrl.u32 %v455, 7
        %v457 = vsub.s32 3, %v456
        %v458 = vrot.slane %v438, %v457
        %v459 = vlaneseq
        %v460 = vshrl.u32 %v459, 7
        %v461 = vsub.s32 3, %v460
        %v462 = vrot.slane %v442, %v461
        %v463 = vlaneseq
        %v464 = vshrl.u32 %v463, 7
        %v465 = vsub.s32 3, %v464
        %v466 = vrot.slane %v446, %v465
        %v467 = vlaneseq
        %v468 = vshrl.u32 %v467, 7
        %v469 = vsub.s32 3, %v468
        %v470 = vrot.slane %v450, %v469
        %v471 = vmul.f32 %v429, %v458
        %v472 = vmul.f32 %v429, %v462
        %v473 = vmul.f32 %v429, %v466
        %v474 = vmul.f32 %v429, %v470
        %v475 = vmul.f32 %v433, %v458
        %v476 = vmul.f32 %v433, %v462
        %v477 = vmul.f32 %v433, %v466
        %v478 = vmul.f32 %v433, %v470
        %v479 = vadd.f32 %v419, %v471
        %v480 = vadd.f32 %v420, %v472
        %v481 = vadd.f32 %v421, %v473
        %v482 = vadd.f32 %v422, %v474
        %v483 = vadd.f32 %v423, %v475
        %v484 = vadd.f32 %v424, %v476
        %v485 = vadd.f32 %v425, %v477
        %v486 = vadd.f32 %v426, %v478
        %v487 = vmax.f32 %v479, 0.0
        %v488 = vmax.f32 %v480, 0.0
        %v489 = vmax.f32 %v481, 0.0
        %v490 = vmax.f32 %v482, 0.0
        %v491 = vmax.f32 %v483, 0.0
        %v492 = vmax.f32 %v484, 0.0
        %v493 = vmax.f32 %v485, 0.0
        %v494 = vmax.f32 %v486, 0.0
        %v495 = vld [vmem:[%s4] sm:$0x3]
        %497 = vset.pattern.permute.xlu0 0
        %498 = vperm.xlu0 %497, %v495
        %v499 = vpop.permute.xlu0 %498
        %502 = vset.pattern.permute.xlu0 0
        %503 = vperm.xlu0 %502, %v230
        %v504 = vpop.permute.xlu0 %503
        %v506 = vlaneseq
        %v507 = vshrl.u32 %v506, 7
        %v508 = vsub.s32 0, %v507
        %v509 = vrot.slane %v487, %v508
        %v510 = vlaneseq
        %v511 = vshrl.u32 %v510, 7
        %v512 = vsub.s32 0, %v511
        %v513 = vrot.slane %v488, %v512
        %v514 = vlaneseq
        %v515 = vshrl.u32 %v514, 7
        %v516 = vsub.s32 0, %v515
        %v517 = vrot.slane %v489, %v516
        %v518 = vlaneseq
        %v519 = vshrl.u32 %v518, 7
        %v520 = vsub.s32 0, %v519
        %v521 = vrot.slane %v490, %v520
        %v522 = vmul.f32 %v504, %v509
        %v523 = vmul.f32 %v504, %v513
        %v524 = vmul.f32 %v504, %v517
        %v525 = vmul.f32 %v504, %v521
        %v526 = vadd.f32 %v499, %v522
        %v527 = vadd.f32 %v499, %v523
        %v528 = vadd.f32 %v499, %v524
        %v529 = vadd.f32 %v499, %v525
        %530 = vset.pattern.permute.xlu0 1
        %531 = vperm.xlu0 %530, %v230
        %v532 = vpop.permute.xlu0 %531
        %v534 = vlaneseq
        %v535 = vshrl.u32 %v534, 7
        %v536 = vsub.s32 1, %v535
        %v537 = vrot.slane %v487, %v536
        %v538 = vlaneseq
        %v539 = vshrl.u32 %v538, 7
        %v540 = vsub.s32 1, %v539
        %v541 = vrot.slane %v488, %v540
        %v542 = vlaneseq
        %v543 = vshrl.u32 %v542, 7
        %v544 = vsub.s32 1, %v543
        %v545 = vrot.slane %v489, %v544
        %v546 = vlaneseq
        %v547 = vshrl.u32 %v546, 7
        %v548 = vsub.s32 1, %v547
        %v549 = vrot.slane %v490, %v548
        %v550 = vmul.f32 %v532, %v537
        %v551 = vmul.f32 %v532, %v541
        %v552 = vmul.f32 %v532, %v545
        %v553 = vmul.f32 %v532, %v549
        %v554 = vadd.f32 %v526, %v550
        %v555 = vadd.f32 %v527, %v551
        %v556 = vadd.f32 %v528, %v552
        %v557 = vadd.f32 %v529, %v553
        %558 = vset.pattern.permute.xlu0 2
        %559 = vperm.xlu0 %558, %v230
        %v560 = vpop.permute.xlu0 %559
        %v562 = vlaneseq
        %v563 = vshrl.u32 %v562, 7
        %v564 = vsub.s32 2, %v563
        %v565 = vrot.slane %v487, %v564
        %v566 = vlaneseq
        %v567 = vshrl.u32 %v566, 7
        %v568 = vsub.s32 2, %v567
        %v569 = vrot.slane %v488, %v568
        %v570 = vlaneseq
        %v571 = vshrl.u32 %v570, 7
        %v572 = vsub.s32 2, %v571
        %v573 = vrot.slane %v489, %v572
        %v574 = vlaneseq
        %v575 = vshrl.u32 %v574, 7
        %v576 = vsub.s32 2, %v575
        %v577 = vrot.slane %v490, %v576
        %v578 = vmul.f32 %v560, %v565
        %v579 = vmul.f32 %v560, %v569
        %v580 = vmul.f32 %v560, %v573
        %v581 = vmul.f32 %v560, %v577
        %v582 = vadd.f32 %v554, %v578
        %v583 = vadd.f32 %v555, %v579
        %v584 = vadd.f32 %v556, %v580
        %v585 = vadd.f32 %v557, %v581
        %586 = vset.pattern.permute.xlu0 3
        %587 = vperm.xlu0 %586, %v230
        %v588 = vpop.permute.xlu0 %587
        %v590 = vlaneseq
        %v591 = vshrl.u32 %v590, 7
        %v592 = vsub.s32 3, %v591
        %v593 = vrot.slane %v487, %v592
        %v594 = vlaneseq
        %v595 = vshrl.u32 %v594, 7
        %v596 = vsub.s32 3, %v595
        %v597 = vrot.slane %v488, %v596
        %v598 = vlaneseq
        %v599 = vshrl.u32 %v598, 7
        %v600 = vsub.s32 3, %v599
        %v601 = vrot.slane %v489, %v600
        %v602 = vlaneseq
        %v603 = vshrl.u32 %v602, 7
        %v604 = vsub.s32 3, %v603
        %v605 = vrot.slane %v490, %v604
        %v606 = vmul.f32 %v588, %v593
        %v607 = vmul.f32 %v588, %v597
        %v608 = vmul.f32 %v588, %v601
        %v609 = vmul.f32 %v588, %v605
        %v610 = vadd.f32 %v582, %v606
        %v611 = vadd.f32 %v583, %v607
        %v612 = vadd.f32 %v584, %v608
        %v613 = vadd.f32 %v585, %v609
        %614 = vset.pattern.permute.xlu0 4
        %615 = vperm.xlu0 %614, %v230
        %v616 = vpop.permute.xlu0 %615
        %v618 = vlaneseq
        %v619 = vshrl.u32 %v618, 7
        %v620 = vsub.s32 4, %v619
        %v621 = vrot.slane %v487, %v620
        %v622 = vlaneseq
        %v623 = vshrl.u32 %v622, 7
        %v624 = vsub.s32 4, %v623
        %v625 = vrot.slane %v488, %v624
        %v626 = vlaneseq
        %v627 = vshrl.u32 %v626, 7
        %v628 = vsub.s32 4, %v627
        %v629 = vrot.slane %v489, %v628
        %v630 = vlaneseq
        %v631 = vshrl.u32 %v630, 7
        %v632 = vsub.s32 4, %v631
        %v633 = vrot.slane %v490, %v632
        %v634 = vmul.f32 %v616, %v621
        %v635 = vmul.f32 %v616, %v625
        %v636 = vmul.f32 %v616, %v629
        %v637 = vmul.f32 %v616, %v633
        %v638 = vadd.f32 %v610, %v634
        %v639 = vadd.f32 %v611, %v635
        %v640 = vadd.f32 %v612, %v636
        %v641 = vadd.f32 %v613, %v637
        %642 = vset.pattern.permute.xlu0 5
        %643 = vperm.xlu0 %642, %v230
        %v644 = vpop.permute.xlu0 %643
        %v646 = vlaneseq
        %v647 = vshrl.u32 %v646, 7
        %v648 = vsub.s32 5, %v647
        %v649 = vrot.slane %v487, %v648
        %v650 = vlaneseq
        %v651 = vshrl.u32 %v650, 7
        %v652 = vsub.s32 5, %v651
        %v653 = vrot.slane %v488, %v652
        %v654 = vlaneseq
        %v655 = vshrl.u32 %v654, 7
        %v656 = vsub.s32 5, %v655
        %v657 = vrot.slane %v489, %v656
        %v658 = vlaneseq
        %v659 = vshrl.u32 %v658, 7
        %v660 = vsub.s32 5, %v659
        %v661 = vrot.slane %v490, %v660
        %v662 = vmul.f32 %v644, %v649
        %v663 = vmul.f32 %v644, %v653
        %v664 = vmul.f32 %v644, %v657
        %v665 = vmul.f32 %v644, %v661
        %v666 = vadd.f32 %v638, %v662
        %v667 = vadd.f32 %v639, %v663
        %v668 = vadd.f32 %v640, %v664
        %v669 = vadd.f32 %v641, %v665
        %670 = vset.pattern.permute.xlu0 6
        %671 = vperm.xlu0 %670, %v230
        %v672 = vpop.permute.xlu0 %671
        %v674 = vlaneseq
        %v675 = vshrl.u32 %v674, 7
        %v676 = vsub.s32 6, %v675
        %v677 = vrot.slane %v487, %v676
        %v678 = vlaneseq
        %v679 = vshrl.u32 %v678, 7
        %v680 = vsub.s32 6, %v679
        %v681 = vrot.slane %v488, %v680
        %v682 = vlaneseq
        %v683 = vshrl.u32 %v682, 7
        %v684 = vsub.s32 6, %v683
        %v685 = vrot.slane %v489, %v684
        %v686 = vlaneseq
        %v687 = vshrl.u32 %v686, 7
        %v688 = vsub.s32 6, %v687
        %v689 = vrot.slane %v490, %v688
        %v690 = vmul.f32 %v672, %v677
        %v691 = vmul.f32 %v672, %v681
        %v692 = vmul.f32 %v672, %v685
        %v693 = vmul.f32 %v672, %v689
        %v694 = vadd.f32 %v666, %v690
        %v695 = vadd.f32 %v667, %v691
        %v696 = vadd.f32 %v668, %v692
        %v697 = vadd.f32 %v669, %v693
        %698 = vset.pattern.permute.xlu0 7
        %699 = vperm.xlu0 %698, %v230
        %v700 = vpop.permute.xlu0 %699
        %v702 = vlaneseq
        %v703 = vshrl.u32 %v702, 7
        %v704 = vsub.s32 7, %v703
        %v705 = vrot.slane %v487, %v704
        %v706 = vlaneseq
        %v707 = vshrl.u32 %v706, 7
        %v708 = vsub.s32 7, %v707
        %v709 = vrot.slane %v488, %v708
        %v710 = vlaneseq
        %v711 = vshrl.u32 %v710, 7
        %v712 = vsub.s32 7, %v711
        %v713 = vrot.slane %v489, %v712
        %v714 = vlaneseq
        %v715 = vshrl.u32 %v714, 7
        %v716 = vsub.s32 7, %v715
        %v717 = vrot.slane %v490, %v716
        %v718 = vmul.f32 %v700, %v705
        %v719 = vmul.f32 %v700, %v709
        %v720 = vmul.f32 %v700, %v713
        %v721 = vmul.f32 %v700, %v717
        %v722 = vadd.f32 %v694, %v718
        %v723 = vadd.f32 %v695, %v719
        %v724 = vadd.f32 %v696, %v720
        %v725 = vadd.f32 %v697, %v721
        %726 = vset.pattern.permute.xlu0 8
        %727 = vperm.xlu0 %726, %v230
        %v728 = vpop.permute.xlu0 %727
        %v730 = vlaneseq
        %v731 = vshrl.u32 %v730, 7
        %v732 = vsub.s32 0, %v731
        %v733 = vrot.slane %v491, %v732
        %v734 = vlaneseq
        %v735 = vshrl.u32 %v734, 7
        %v736 = vsub.s32 0, %v735
        %v737 = vrot.slane %v492, %v736
        %v738 = vlaneseq
        %v739 = vshrl.u32 %v738, 7
        %v740 = vsub.s32 0, %v739
        %v741 = vrot.slane %v493, %v740
        %v742 = vlaneseq
        %v743 = vshrl.u32 %v742, 7
        %v744 = vsub.s32 0, %v743
        %v745 = vrot.slane %v494, %v744
        %v746 = vmul.f32 %v728, %v733
        %v747 = vmul.f32 %v728, %v737
        %v748 = vmul.f32 %v728, %v741
        %v749 = vmul.f32 %v728, %v745
        %v750 = vadd.f32 %v722, %v746
        %v751 = vadd.f32 %v723, %v747
        %v752 = vadd.f32 %v724, %v748
        %v753 = vadd.f32 %v725, %v749
        %754 = vset.pattern.permute.xlu0 9
        %755 = vperm.xlu0 %754, %v230
        %v756 = vpop.permute.xlu0 %755
        %v758 = vlaneseq
        %v759 = vshrl.u32 %v758, 7
        %v760 = vsub.s32 1, %v759
        %v761 = vrot.slane %v491, %v760
        %v762 = vlaneseq
        %v763 = vshrl.u32 %v762, 7
        %v764 = vsub.s32 1, %v763
        %v765 = vrot.slane %v492, %v764
        %v766 = vlaneseq
        %v767 = vshrl.u32 %v766, 7
        %v768 = vsub.s32 1, %v767
        %v769 = vrot.slane %v493, %v768
        %v770 = vlaneseq
        %v771 = vshrl.u32 %v770, 7
        %v772 = vsub.s32 1, %v771
        %v773 = vrot.slane %v494, %v772
        %v774 = vmul.f32 %v756, %v761
        %v775 = vmul.f32 %v756, %v765
        %v776 = vmul.f32 %v756, %v769
        %v777 = vmul.f32 %v756, %v773
        %v778 = vadd.f32 %v750, %v774
        %v779 = vadd.f32 %v751, %v775
        %v780 = vadd.f32 %v752, %v776
        %v781 = vadd.f32 %v753, %v777
        %782 = vset.pattern.permute.xlu0 10
        %783 = vperm.xlu0 %782, %v230
        %v784 = vpop.permute.xlu0 %783
        %v786 = vlaneseq
        %v787 = vshrl.u32 %v786, 7
        %v788 = vsub.s32 2, %v787
        %v789 = vrot.slane %v491, %v788
        %v790 = vlaneseq
        %v791 = vshrl.u32 %v790, 7
        %v792 = vsub.s32 2, %v791
        %v793 = vrot.slane %v492, %v792
        %v794 = vlaneseq
        %v795 = vshrl.u32 %v794, 7
        %v796 = vsub.s32 2, %v795
        %v797 = vrot.slane %v493, %v796
        %v798 = vlaneseq
        %v799 = vshrl.u32 %v798, 7
        %v800 = vsub.s32 2, %v799
        %v801 = vrot.slane %v494, %v800
        %v802 = vmul.f32 %v784, %v789
        %v803 = vmul.f32 %v784, %v793
        %v804 = vmul.f32 %v784, %v797
        %v805 = vmul.f32 %v784, %v801
        %v806 = vadd.f32 %v778, %v802
        %v807 = vadd.f32 %v779, %v803
        %v808 = vadd.f32 %v780, %v804
        %v809 = vadd.f32 %v781, %v805
        %810 = vset.pattern.permute.xlu0 11
        %811 = vperm.xlu0 %810, %v230
        %v812 = vpop.permute.xlu0 %811
        %v814 = vlaneseq
        %v815 = vshrl.u32 %v814, 7
        %v816 = vsub.s32 3, %v815
        %v817 = vrot.slane %v491, %v816
        %v818 = vlaneseq
        %v819 = vshrl.u32 %v818, 7
        %v820 = vsub.s32 3, %v819
        %v821 = vrot.slane %v492, %v820
        %v822 = vlaneseq
        %v823 = vshrl.u32 %v822, 7
        %v824 = vsub.s32 3, %v823
        %v825 = vrot.slane %v493, %v824
        %v826 = vlaneseq
        %v827 = vshrl.u32 %v826, 7
        %v828 = vsub.s32 3, %v827
        %v829 = vrot.slane %v494, %v828
        %v830 = vmul.f32 %v812, %v817
        %v831 = vmul.f32 %v812, %v821
        %v832 = vmul.f32 %v812, %v825
        %v833 = vmul.f32 %v812, %v829
        %v834 = vadd.f32 %v806, %v830
        %v835 = vadd.f32 %v807, %v831
        %v836 = vadd.f32 %v808, %v832
        %v837 = vadd.f32 %v809, %v833
        %v842 = vrot.slane %v834, 7
        %v843 = vrot.slane %v835, 7
        %v844 = vrot.slane %v836, 7
        %v845 = vrot.slane %v837, 7
        %v850 = vsub.f32 %v834, %v842
        %v851 = vsub.f32 %v835, %v843
        %v852 = vsub.f32 %v836, %v844
        %v853 = vsub.f32 %v837, %v845
        %v854 = vand.u32 2147483647, %v850
        %v855 = vand.u32 2147483647, %v851
        %v856 = vand.u32 2147483647, %v852
        %v857 = vand.u32 2147483647, %v853
        %v858 = vsub.f32 0.0, %v854
        %v859 = vsub.f32 0.0, %v855
        %v860 = vsub.f32 0.0, %v856
        %v861 = vsub.f32 0.0, %v857
        %v862 = vmul.f32 %v858, 1.442695
        %v863 = vpow.pop %v862
        %v864 = vmul.f32 %v859, 1.442695
        %v865 = vpow.pop %v864
        %v866 = vmul.f32 %v860, 1.442695
        %v867 = vpow.pop %v866
        %v868 = vmul.f32 %v861, 1.442695
        %v869 = vpow.pop %v868
        %v870 = vadd.f32 %v863, 1.0
        %v871 = vadd.f32 %v865, 1.0
        %v872 = vadd.f32 %v867, 1.0
        %v873 = vadd.f32 %v869, 1.0
        %v874 = vrcp.pop %v870
        %v875 = vrcp.pop %v871
        %v876 = vrcp.pop %v872
        %v877 = vrcp.pop %v873
        %vm878 = vcmp.ge.f32.partialorder %v850, 0.0
        %vm879 = vcmp.ge.f32.partialorder %v851, 0.0
        %vm880 = vcmp.ge.f32.partialorder %v852, 0.0
        %vm881 = vcmp.ge.f32.partialorder %v853, 0.0
        %v882 = vsub.f32 1.0, %v874
        %v883 = vsub.f32 1.0, %v875
        %v884 = vsub.f32 1.0, %v876
        %v885 = vsub.f32 1.0, %v877
        %v886 = vsel %vm878, %v874, %v882
        %v887 = vsel %vm879, %v875, %v883
        %v888 = vsel %vm880, %v876, %v884
        %v889 = vsel %vm881, %v877, %v885
        %v890 = vsub.f32 1.0, %v886
        %v891 = vsub.f32 1.0, %v887
        %v892 = vsub.f32 1.0, %v888
        %v893 = vsub.f32 1.0, %v889
        %v898 = vcombine.low %v890, %v891
        %v899 = vcombine.low %v892, %v893
        %v901 = vunpack.c.l.s4 1966171168
        %v902 = vunpack.c.0.s8 %v901
        %v903 = vlaneseq
        %v904 = vshrl.u32 %v903, 7
        %v905 = vsub.s32 %v902, %v904
        %v906 = vrot.slane %v898, %v905
        %v908 = vunpack.c.l.s4 1966171168
        %v909 = vunpack.c.0.s8 %v908
        %v910 = vlaneseq
        %v911 = vshrl.u32 %v910, 7
        %v912 = vsub.s32 %v909, %v911
        %v913 = vrot.slane %v899, %v912
        %v914 = vcombine.high %v906, %v913
        %v916 = vunpack.c.l.s4 1966171168
        %v917 = vunpack.c.0.s8 %v916
        %v918 = vlaneseq
        %v919 = vshrl.u32 %v918, 7
        %v920 = vsub.s32 %v917, %v919
        %v921 = vrot.slane %v914, %v920
        %v923 = vlaneseq
        %vm924 = vcmp.ge.s32.totalorder %v923, 0
        %vm925 = vcmp.lt.s32.totalorder %v923, 512
        %vm926 = vmand %vm924, %vm925
        %927 = vst.msk [vmem:[%s218] ss:$2 sm:$0xf] %vm926, %v921
        %v932 = vcombine.low %v886, %v887
        %v933 = vcombine.low %v888, %v889
        %v935 = vunpack.c.l.s4 1966171168
        %v936 = vunpack.c.0.s8 %v935
        %v937 = vlaneseq
        %v938 = vshrl.u32 %v937, 7
        %v939 = vsub.s32 %v936, %v938
        %v940 = vrot.slane %v932, %v939
        %v942 = vunpack.c.l.s4 1966171168
        %v943 = vunpack.c.0.s8 %v942
        %v944 = vlaneseq
        %v945 = vshrl.u32 %v944, 7
        %v946 = vsub.s32 %v943, %v945
        %v947 = vrot.slane %v933, %v946
        %v948 = vcombine.high %v940, %v947
        %v950 = vunpack.c.l.s4 1966171168
        %v951 = vunpack.c.0.s8 %v950
        %v952 = vlaneseq
        %v953 = vshrl.u32 %v952, 7
        %v954 = vsub.s32 %v951, %v953
        %v955 = vrot.slane %v948, %v954
        %s957 = scalar_lea.vmem %s218, 1 [#allocation2]
        %958 = vst.msk [vmem:[%s957] ss:$2 sm:$0xf] %vm926, %v955
        %s959 = sand.u32 %s137, 1
        %s960 = scalar_lea.sflag [#allocation3], %s959
        %s961 = sand.u32 %s137, 1
        %s962 = smul.addr %s961, 8
        %s963 = scalar_lea.vmem [#allocation2], %s962
        // Predicated region
        $region41: #{tpu_custom_call.1} parent=39 // pred_check
          %p964 = pneg %p147
        $region42: #{tpu_custom_call.1} parent=39 // pred_check_branch
          %966 = sbr.rel (%p964) target = $region44
        $region43: #{tpu_custom_call.1} parent=39 // pred_region
          %s967 = smul.u32 4, %s19
          %s969 = ssub.s32 128, 128
          %970 = vsyncadd %s960, %s969
          %s971 = smul.addr %s967, 32
          %s972 = scalar_lea.hbm %s5, %s971
          %s974 = sshll.u32 %s963, 4
          %s975 = int_to_ptr.vmem [resolvable:$true] %s974
          %977 = dma.vmem_to_hbm [thread:$0]  %s975, 128, %s972, %s960
        $region44: #{tpu_custom_call.1} parent=39 // pred_fallthru
          _
      $region40: #{tpu_custom_call.1} parent=5 // pred_fallthru
        _
      %p978 = scmp.le.s32.totalorder 2, %s14
      // Predicated region
      $region45: #{tpu_custom_call.1} parent=5 // pred_check
        %p979 = pneg %p978
      $region46: #{tpu_custom_call.1} parent=5 // pred_check_branch
        %981 = sbr.rel (%p979) target = $region48
      $region47: #{tpu_custom_call.1} parent=5 // pred_region
        %s982 = ssub.s32 %s14, 2
        // Predicated region
        $region49: #{tpu_custom_call.1} parent=47 // pred_check
          %p983 = pneg %p153
        $region50: #{tpu_custom_call.1} parent=47 // pred_check_branch
          %985 = sbr.rel (%p983) target = $region52
        $region51: #{tpu_custom_call.1} parent=47 // pred_region
          %s986 = sand.u32 %s138, 1
          %s987 = scalar_lea.sflag [#allocation3], %s986
          %s988 = sand.u32 %s138, 1
          %s989 = smul.addr %s988, 8
          %s990 = scalar_lea.vmem [#allocation2], %s989
          %991 = dma.done %s987, 128
        $region52: #{tpu_custom_call.1} parent=47 // pred_fallthru
          _
      $region48: #{tpu_custom_call.1} parent=5 // pred_fallthru
        _
    $region6: #{tpu_custom_call.1} parent=1 // loop_footer
      %s18 = sadd.s32 1, %s14
    $region7: #{tpu_custom_call.1} parent=1 // loop_footer_branch
      %13 = sbr.rel target = $region3
    $region8: #{tpu_custom_call.1} parent=1 // loop_exit
      _
    %992 = vsyncpa [#allocation3], 1
    %s993 = scalar_lea.sflag [#allocation3], 1
    %994 = vsyncpa %s993, 1

</llo_original>
